<compile_context>
chip_gen: v6e
topology: v6e:2x2x1
jax: 0.10.0
libtpu: 0.0.40
codegen_flags: <defaults>
</compile_context>

<pallas_src>
from functools import partial

import jax
import jax.numpy as jnp
from jax.experimental import pallas as pl
from jax.experimental.pallas import tpu as pltpu

NUM_LAYERS = 1        # module default
NUM_NEURONS = 5       # module default

LANE = 128            # TPU lane width; batch points live on the minor (lane) axis
MAX_TILE_ROWS = 2048  # 2048 rows x 128 lanes x 4 B = 1 MiB per in/out block


def _round_up(v, m):
    return ((v + m - 1) // m) * m


def mlp_kernel(x_ref, a_ref, c_ref, wh_ref, bh_ref, wf_ref, bf_ref, o_ref,
               *, num_layers, num_neurons):
    """One lane-dense batch tile of the tiny MLP as scalar-broadcast VPU FMAs.

    x_ref : (R, 128) VMEM  -- batch points
    a_ref : (N,)     SMEM  -- folded first-layer scale   (Wh[0] @ w0)
    c_ref : (N,)     SMEM  -- folded first-layer bias    (Wh[0] @ b0 + bh[0])
    wh_ref: ((L-1)*N*N,) SMEM -- remaining hidden weights, [l, out, in] row-major
                                  (dummy (1,) when L == 1; never read)
    bh_ref: ((L-1)*N,)   SMEM -- remaining hidden biases (dummy (1,) when L == 1)
    wf_ref: (N,)     SMEM  -- Linear(N, 1) weight row
    bf_ref: (1,)     SMEM
    o_ref : (R, 128) VMEM
    """
    n = num_neurons
    x = x_ref[...]                                             # (R, 128) f32

    if num_layers == 1:
        # Folded first layer IS the last hidden layer: fuse the output
        # reduction directly -> ~3 live (R,128) temporaries total.
        out = jnp.tanh(x * a_ref[0] + c_ref[0]) * wf_ref[0]
        for j in range(1, n):
            out = out + jnp.tanh(x * a_ref[j] + c_ref[j]) * wf_ref[j]
        o_ref[...] = out + bf_ref[0]
        return

    # num_layers >= 2
    # Folded first hidden layer.
    h = [jnp.tanh(x * a_ref[j] + c_ref[j]) for j in range(n)]

    # Middle hidden layers (full N x N + tanh), statically unrolled.
    for l in range(num_layers - 2):
        z = []
        for j in range(n):
            acc = h[0] * wh_ref[l * n * n + j * n + 0]
            for k in range(1, n):
                acc = acc + h[k] * wh_ref[l * n * n + j * n + k]
            z.append(jnp.tanh(acc + bh_ref[l * n + j]))
        h = z

    # Last hidden layer: fuse the Linear(N, 1) reduction into it.
    l = num_layers - 2
    out = None
    for j in range(n):
        acc = h[0] * wh_ref[l * n * n + j * n + 0]
        for k in range(1, n):
            acc = acc + h[k] * wh_ref[l * n * n + j * n + k]
        zj = jnp.tanh(acc + bh_ref[l * n + j])
        out = zj * wf_ref[j] if out is None else out + zj * wf_ref[j]
    o_ref[...] = out + bf_ref[0]


def init_params(key, num_layers=NUM_LAYERS, num_neurons=NUM_NEURONS):
    """PyTorch-style U(-1/sqrt(fan_in), 1/sqrt(fan_in)) init.

    Returns the raw (torch-convention [out, in]) params for the reference and
    the folded/flattened f32 arrays (destined for SMEM) used by the kernel.
    """
    n_linear = num_layers + 2
    keys = jax.random.split(key, 2 * n_linear)

    def linear(kw, kb, fan_in, fan_out):
        bound = 1.0 / jnp.sqrt(jnp.float32(fan_in))
        W = jax.random.uniform(kw, (fan_out, fan_in), jnp.float32, -bound, bound)
        b = jax.random.uniform(kb, (fan_out,), jnp.float32, -bound, bound)
        return W, b

    W0, b0 = linear(keys[0], keys[1], 1, num_neurons)
    hidden = [linear(keys[2 + 2 * l], keys[3 + 2 * l], num_neurons, num_neurons)
              for l in range(num_layers)]
    Wf, bf = linear(keys[2 + 2 * num_layers], keys[3 + 2 * num_layers], num_neurons, 1)
    raw = ((W0, b0), hidden, (Wf, bf))

    # Host-side weight fold: Linear(1,N) into the first hidden Linear(N,N).
    Wh0, bh0 = hidden[0]
    a_k = Wh0 @ W0[:, 0]                                    # (N,)
    c_k = Wh0 @ b0 + bh0                                    # (N,)
    if num_layers > 1:
        wh_k = jnp.stack([W for W, _ in hidden[1:]]).reshape(-1)   # ((L-1)*N*N,)
        bh_k = jnp.stack([b for _, b in hidden[1:]]).reshape(-1)   # ((L-1)*N,)
    else:
        wh_k = jnp.zeros((1,), jnp.float32)                 # dummy, never read
        bh_k = jnp.zeros((1,), jnp.float32)
    wf_k = Wf[0]                                            # (N,)
    bf_k = bf                                               # (1,)
    packed = (a_k, c_k, wh_k, bh_k, wf_k, bf_k)
    return raw, packed


def neural_network_forward(x, packed_params, *, num_layers=NUM_LAYERS,
                           num_neurons=NUM_NEURONS):
    a, c, wh, bh, wf, bf = packed_params

    flat = x.reshape(-1).astype(jnp.float32)        # matches torch x.reshape(-1, 1)
    n = flat.shape[0]

    # Lane-dense packing: batch points on (sublane, lane) axes of (8,128) tiles.
    rows = _round_up(pl.cdiv(n, LANE), 8)
    tile_rows = min(rows, MAX_TILE_ROWS)
    if 8 < rows <= MAX_TILE_ROWS:
        # Split into >= 2 tiles so v7x's two TensorCores both get work.
        tile_rows = _round_up(pl.cdiv(rows, 2), 8)
    rows = _round_up(rows, tile_rows)
    num_tiles = rows // tile_rows
    padded = rows * LANE

    if padded == n:
        xp = flat.reshape(rows, LANE)                       # free contiguous reshape
    else:
        # Single-pass tail pad (no zeros+scatter full-array rewrite).
        # TODO(synk): for huge B, mask the tail store in-kernel instead and let
        # callers consume the padded layout to drop the trailing [:n] copy too.
        xp = jnp.pad(flat, (0, padded - n)).reshape(rows, LANE)

    smem = pl.BlockSpec(memory_space=pltpu.MemorySpace.SMEM)

    out = pl.pallas_call(
        partial(mlp_kernel, num_layers=num_layers, num_neurons=num_neurons),
        grid=(num_tiles,),
        in_specs=[
            pl.BlockSpec((tile_rows, LANE), lambda i: (i, 0)),
            smem, smem, smem, smem, smem, smem,
        ],
        out_specs=pl.BlockSpec((tile_rows, LANE), lambda i: (i, 0)),
        out_shape=jax.ShapeDtypeStruct((rows, LANE), jnp.float32),
        compiler_params=pltpu.CompilerParams(
            dimension_semantics=("parallel",),
            # double-buffered 1 MiB in + out blocks + ~3 live (R,128) f32
            # temporaries: ~8 MiB; 32 MiB fits v5e/v6e/v7x comfortably.
            vmem_limit_bytes=32 * 1024 * 1024),
    )(xp, a, c, wh, bh, wf, bf)

    res = out.reshape(padded)
    if padded != n:
        res = res[:n]
    return jnp.squeeze(res)                                 # matches torch .squeeze()


def reference_forward(x, raw_params):
    (W0, b0), hidden, (Wf, bf) = raw_params
    h = x.reshape(-1, 1).astype(jnp.float32) @ W0.T + b0
    for (W, b) in hidden:
        h = jnp.tanh(h @ W.T + b)
    out = h @ Wf.T + bf
    return out.squeeze()


if __name__ == "__main__":
    key = jax.random.PRNGKey(0)
    kp, kx = jax.random.split(key)

    raw_params, packed_params = init_params(kp)

    # small input; forward flattens it to (-1, 1) -> B = 128 points
    x = jax.random.normal(kx, (8, 16), dtype=jnp.float32)

    y = neural_network_forward(x, packed_params)
    y = jax.block_until_ready(y)

    y_ref = reference_forward(x, raw_params)
    assert y.shape == y_ref.shape == (x.size,)
    assert jnp.allclose(y, y_ref, atol=1e-5, rtol=1e-5), "mismatch vs pure-JAX reference"

    print("KERNEL_OK")
</pallas_src>

<mosaic_0001>
module attributes {stable_mosaic.version = 11 : i64} {
  func.func @mlp_kernel(%arg0: i32, %arg1: memref<8x128xf32, #tpu.memory_space<vmem>>, %arg2: memref<5xf32, #tpu.memory_space<smem>>, %arg3: memref<5xf32, #tpu.memory_space<smem>>, %arg4: memref<1xf32, #tpu.memory_space<smem>>, %arg5: memref<1xf32, #tpu.memory_space<smem>>, %arg6: memref<5xf32, #tpu.memory_space<smem>>, %arg7: memref<1xf32, #tpu.memory_space<smem>>, %arg8: memref<8x128xf32, #tpu.memory_space<vmem>>) attributes {dimension_semantics = [#tpu.dimension_semantics<parallel>], iteration_bounds = array<i64: 1>, scalar_prefetch = 0 : i64, scratch_operands = 0 : i64, tpu.core_type = #tpu.core_type<tc>, window_params = [{transform_indices = @transform_0, window_bounds = array<i64: 8, 128>}, {transform_indices = @transform_1, window_bounds = array<i64: 5>}, {transform_indices = @transform_2, window_bounds = array<i64: 5>}, {transform_indices = @transform_3, window_bounds = array<i64: 1>}, {transform_indices = @transform_4, window_bounds = array<i64: 1>}, {transform_indices = @transform_5, window_bounds = array<i64: 5>}, {transform_indices = @transform_6, window_bounds = array<i64: 1>}, {transform_indices = @transform_7, window_bounds = array<i64: 8, 128>}]} {
    %c0 = arith.constant 0 : index
    %c0_0 = arith.constant 0 : index
    %0 = vector.load %arg1[%c0, %c0_0] : memref<8x128xf32, #tpu.memory_space<vmem>>, vector<8x128xf32>
    %c0_1 = arith.constant 0 : index
    %1 = memref.load %arg2[%c0_1] : memref<5xf32, #tpu.memory_space<smem>>
    %2 = vector.broadcast %1 : f32 to vector<8x128xf32>
    %3 = arith.mulf %0, %2 : vector<8x128xf32>
    %c0_2 = arith.constant 0 : index
    %4 = memref.load %arg3[%c0_2] : memref<5xf32, #tpu.memory_space<smem>>
    %5 = vector.broadcast %4 : f32 to vector<8x128xf32>
    %6 = arith.addf %3, %5 : vector<8x128xf32>
    %7 = math.tanh %6 : vector<8x128xf32>
    %c0_3 = arith.constant 0 : index
    %8 = memref.load %arg6[%c0_3] : memref<5xf32, #tpu.memory_space<smem>>
    %9 = vector.broadcast %8 : f32 to vector<8x128xf32>
    %10 = arith.mulf %7, %9 : vector<8x128xf32>
    %c1 = arith.constant 1 : index
    %11 = memref.load %arg2[%c1] : memref<5xf32, #tpu.memory_space<smem>>
    %12 = vector.broadcast %11 : f32 to vector<8x128xf32>
    %13 = arith.mulf %0, %12 : vector<8x128xf32>
    %c1_4 = arith.constant 1 : index
    %14 = memref.load %arg3[%c1_4] : memref<5xf32, #tpu.memory_space<smem>>
    %15 = vector.broadcast %14 : f32 to vector<8x128xf32>
    %16 = arith.addf %13, %15 : vector<8x128xf32>
    %17 = math.tanh %16 : vector<8x128xf32>
    %c1_5 = arith.constant 1 : index
    %18 = memref.load %arg6[%c1_5] : memref<5xf32, #tpu.memory_space<smem>>
    %19 = vector.broadcast %18 : f32 to vector<8x128xf32>
    %20 = arith.mulf %17, %19 : vector<8x128xf32>
    %21 = arith.addf %10, %20 : vector<8x128xf32>
    %c2 = arith.constant 2 : index
    %22 = memref.load %arg2[%c2] : memref<5xf32, #tpu.memory_space<smem>>
    %23 = vector.broadcast %22 : f32 to vector<8x128xf32>
    %24 = arith.mulf %0, %23 : vector<8x128xf32>
    %c2_6 = arith.constant 2 : index
    %25 = memref.load %arg3[%c2_6] : memref<5xf32, #tpu.memory_space<smem>>
    %26 = vector.broadcast %25 : f32 to vector<8x128xf32>
    %27 = arith.addf %24, %26 : vector<8x128xf32>
    %28 = math.tanh %27 : vector<8x128xf32>
    %c2_7 = arith.constant 2 : index
    %29 = memref.load %arg6[%c2_7] : memref<5xf32, #tpu.memory_space<smem>>
    %30 = vector.broadcast %29 : f32 to vector<8x128xf32>
    %31 = arith.mulf %28, %30 : vector<8x128xf32>
    %32 = arith.addf %21, %31 : vector<8x128xf32>
    %c3 = arith.constant 3 : index
    %33 = memref.load %arg2[%c3] : memref<5xf32, #tpu.memory_space<smem>>
    %34 = vector.broadcast %33 : f32 to vector<8x128xf32>
    %35 = arith.mulf %0, %34 : vector<8x128xf32>
    %c3_8 = arith.constant 3 : index
    %36 = memref.load %arg3[%c3_8] : memref<5xf32, #tpu.memory_space<smem>>
    %37 = vector.broadcast %36 : f32 to vector<8x128xf32>
    %38 = arith.addf %35, %37 : vector<8x128xf32>
    %39 = math.tanh %38 : vector<8x128xf32>
    %c3_9 = arith.constant 3 : index
    %40 = memref.load %arg6[%c3_9] : memref<5xf32, #tpu.memory_space<smem>>
    %41 = vector.broadcast %40 : f32 to vector<8x128xf32>
    %42 = arith.mulf %39, %41 : vector<8x128xf32>
    %43 = arith.addf %32, %42 : vector<8x128xf32>
    %c4 = arith.constant 4 : index
    %44 = memref.load %arg2[%c4] : memref<5xf32, #tpu.memory_space<smem>>
    %45 = vector.broadcast %44 : f32 to vector<8x128xf32>
    %46 = arith.mulf %0, %45 : vector<8x128xf32>
    %c4_10 = arith.constant 4 : index
    %47 = memref.load %arg3[%c4_10] : memref<5xf32, #tpu.memory_space<smem>>
    %48 = vector.broadcast %47 : f32 to vector<8x128xf32>
    %49 = arith.addf %46, %48 : vector<8x128xf32>
    %50 = math.tanh %49 : vector<8x128xf32>
    %c4_11 = arith.constant 4 : index
    %51 = memref.load %arg6[%c4_11] : memref<5xf32, #tpu.memory_space<smem>>
    %52 = vector.broadcast %51 : f32 to vector<8x128xf32>
    %53 = arith.mulf %50, %52 : vector<8x128xf32>
    %54 = arith.addf %43, %53 : vector<8x128xf32>
    %c0_12 = arith.constant 0 : index
    %55 = memref.load %arg7[%c0_12] : memref<1xf32, #tpu.memory_space<smem>>
    %56 = vector.broadcast %55 : f32 to vector<8x128xf32>
    %57 = arith.addf %54, %56 : vector<8x128xf32>
    %c0_13 = arith.constant 0 : index
    %c0_14 = arith.constant 0 : index
    %58 = vector.load %arg8[%c0_13, %c0_14] : memref<8x128xf32, #tpu.memory_space<vmem>>, vector<8x128xf32>
    tpu.vector_store %arg8[%c0_13, %c0_14], %57 {strides = array<i32>} : memref<8x128xf32, #tpu.memory_space<vmem>>, vector<8x128xf32>,
    return
  }
  func.func @transform_0(%arg0: i32) -> (i32, i32) {
    %c0_i32 = arith.constant 0 : i32
    %c0_i32_0 = arith.constant 0 : i32
    return %arg0, %c0_i32 : i32, i32
  }
  func.func @transform_1(%arg0: i32) -> i32 {
    %c0_i32 = arith.constant 0 : i32
    %c0_i32_0 = arith.constant 0 : i32
    return %c0_i32 : i32
  }
  func.func @transform_2(%arg0: i32) -> i32 {
    %c0_i32 = arith.constant 0 : i32
    %c0_i32_0 = arith.constant 0 : i32
    return %c0_i32 : i32
  }
  func.func @transform_3(%arg0: i32) -> i32 {
    %c0_i32 = arith.constant 0 : i32
    %c0_i32_0 = arith.constant 0 : i32
    return %c0_i32 : i32
  }
  func.func @transform_4(%arg0: i32) -> i32 {
    %c0_i32 = arith.constant 0 : i32
    %c0_i32_0 = arith.constant 0 : i32
    return %c0_i32 : i32
  }
  func.func @transform_5(%arg0: i32) -> i32 {
    %c0_i32 = arith.constant 0 : i32
    %c0_i32_0 = arith.constant 0 : i32
    return %c0_i32 : i32
  }
  func.func @transform_6(%arg0: i32) -> i32 {
    %c0_i32 = arith.constant 0 : i32
    %c0_i32_0 = arith.constant 0 : i32
    return %c0_i32 : i32
  }
  func.func @transform_7(%arg0: i32) -> (i32, i32) {
    %c0_i32 = arith.constant 0 : i32
    %c0_i32_0 = arith.constant 0 : i32
    return %arg0, %c0_i32 : i32, i32
  }
}

</mosaic_0001>

<llo_original>
// kernel: tpu_custom_call.1
$region0: #{tpu_custom_call.1}
  #allocation0 [shape = 'u32[]', space=smem, size = 0x4, offset = 0x4, fixed_abs, tag = 'smem constant byte address 0x4 - core index']
  #allocation1 [shape = 'u32[144,128]{1,0:T(1,128)}', space=vmem, size = 0x12000, scoped, tag = 'internal scratch']
  #allocation2 [shape = 'f32[1]{0:T(128)S(6)}', space=smem, size = 0x200, scoped, tag = 'scoped memory for tpu_custom_call.1']
  #allocation3 [shape = 'f32[1]{0:T(128)S(6)}', space=smem, size = 0x200, scoped, tag = 'scoped memory for tpu_custom_call.1']
  #allocation4 [shape = 'f32[1]{0:T(128)S(6)}', space=smem, size = 0x200, scoped, tag = 'scoped memory for tpu_custom_call.1']
  %s0 = inlined_call_operand.hbm [shape: f32[8,128], index: 0, kind: input, shape index: {}]
  %s1 = inlined_call_operand.vmem [shape: f32[5], index: 1, kind: input, shape index: {}]
  %s2 = inlined_call_operand.vmem [shape: f32[5], index: 2, kind: input, shape index: {}]
  %s3 = inlined_call_operand.<no memory space> [shape: f32[1], index: 3, kind: input, shape index: {}]
  %s4 = inlined_call_operand.<no memory space> [shape: f32[1], index: 4, kind: input, shape index: {}]
  %s5 = inlined_call_operand.vmem [shape: f32[5], index: 5, kind: input, shape index: {}]
  %s6 = inlined_call_operand.<no memory space> [shape: f32[1], index: 6, kind: input, shape index: {}]
  %s7 = inlined_call_operand.hbm [shape: f32[8,128], index: 7, kind: output, shape index: {}]
  %s8 = sld [smem:[#allocation0]]
  $region54: #{tpu_custom_call.1} parent=0
    _
  %s10 = ssub.s32 1, %s8
  %s11 = scalar_select 0, %s10, %s8
  %12 = sst [smem:[#allocation2]] %s3
  %13 = sst [smem:[#allocation3]] %s4
  %14 = sst [smem:[#allocation4]] %s6
  $region1: #{tpu_custom_call.1} parent=0
    #allocation5 [shape = 'u8[4096]{0}', space=vmem, size = 0x1000, scoped, tag = 'input window, operand 0, single buffered']
    #allocation6 [shape = 's32[1]{0}', space=sflag, size = 0x4, scoped, tag = 'scoped memory for tpu_custom_call.1']
    #allocation7 [shape = 's32[1]{0}', space=sflag, size = 0x4, scoped, tag = 'scoped memory for tpu_custom_call.1']
    #allocation8 [shape = 's32[1]{0}', space=sflag, size = 0x4, scoped, tag = 'scoped memory for tpu_custom_call.1']
    #allocation9 [shape = 'u8[512]{0}', space=smem, size = 0x200, scoped, tag = 'input window, operand 1, single buffered']
    #allocation10 [shape = 'u8[512]{0}', space=smem, size = 0x200, scoped, tag = 'input window, operand 2, single buffered']
    #allocation11 [shape = 's32[1]{0}', space=sflag, size = 0x4, scoped, tag = 'scoped memory for tpu_custom_call.1']
    #allocation12 [shape = 'u8[512]{0}', space=smem, size = 0x200, scoped, tag = 'input window, operand 5, single buffered']
    #allocation13 [shape = 'u8[4096]{0}', space=vmem, size = 0x1000, scoped, tag = 'output window, operand 0, single buffered']
    %15 = vsyncpa [#allocation6], 0
    %16 = vsyncpa [#allocation8], 0
    %17 = vsyncpa [#allocation11], 0
    %18 = vsyncpa [#allocation7], 0
    // Predicated region
    $region2: #{tpu_custom_call.1} parent=1 // pred_check
      _
    $region3: #{tpu_custom_call.1} parent=1 // pred_check_branch
      %20 = sbr.rel (0) target = $region5
    $region4: #{tpu_custom_call.1} parent=1 // pred_region
      %s22 = ssub.s32 128, 128
      %23 = vsyncadd [#allocation6], %s22
      %s25 = sshll.u32 [#allocation5], 4
      %s26 = int_to_ptr.vmem [resolvable:$true] %s25
      %28 = dma.hbm_to_vmem [thread:$0]  %s0, 128, %s26, [#allocation6]
    $region5: #{tpu_custom_call.1} parent=1 // pred_fallthru
      _
    // Predicated region
    $region6: #{tpu_custom_call.1} parent=1 // pred_check
      _
    $region7: #{tpu_custom_call.1} parent=1 // pred_check_branch
      %30 = sbr.rel (0) target = $region9
    $region8: #{tpu_custom_call.1} parent=1 // pred_region
      %s32 = ssub.s32 16, 16
      %33 = vsyncadd [#allocation8], %s32
      %s35 = sshll.u32 %s1, 4
      %s36 = int_to_ptr.vmem [resolvable:$true] %s35
      %38 = dma.vmem_to_smem %s36, 16, [#allocation9], [#allocation8]
    $region9: #{tpu_custom_call.1} parent=1 // pred_fallthru
      _
    // Predicated region
    $region10: #{tpu_custom_call.1} parent=1 // pred_check
      _
    $region11: #{tpu_custom_call.1} parent=1 // pred_check_branch
      %40 = sbr.rel (0) target = $region13
    $region12: #{tpu_custom_call.1} parent=1 // pred_region
      %s42 = ssub.s32 16, 16
      %43 = vsyncadd [#allocation11], %s42
      %s45 = sshll.u32 %s2, 4
      %s46 = int_to_ptr.vmem [resolvable:$true] %s45
      %48 = dma.vmem_to_smem %s46, 16, [#allocation10], [#allocation11]
    $region13: #{tpu_custom_call.1} parent=1 // pred_fallthru
      _
    // Predicated region
    $region14: #{tpu_custom_call.1} parent=1 // pred_check
      _
    $region15: #{tpu_custom_call.1} parent=1 // pred_check_branch
      %50 = sbr.rel (0) target = $region17
    $region16: #{tpu_custom_call.1} parent=1 // pred_region
      _
    $region17: #{tpu_custom_call.1} parent=1 // pred_fallthru
      _
    // Predicated region
    $region18: #{tpu_custom_call.1} parent=1 // pred_check
      _
    $region19: #{tpu_custom_call.1} parent=1 // pred_check_branch
      %52 = sbr.rel (0) target = $region21
    $region20: #{tpu_custom_call.1} parent=1 // pred_region
      _
    $region21: #{tpu_custom_call.1} parent=1 // pred_fallthru
      _
    // Predicated region
    $region22: #{tpu_custom_call.1} parent=1 // pred_check
      _
    $region23: #{tpu_custom_call.1} parent=1 // pred_check_branch
      %54 = sbr.rel (0) target = $region25
    $region24: #{tpu_custom_call.1} parent=1 // pred_region
      %s56 = ssub.s32 16, 16
      %57 = vsyncadd [#allocation11], %s56
      %s59 = sshll.u32 %s5, 4
      %s60 = int_to_ptr.vmem [resolvable:$true] %s59
      %62 = dma.vmem_to_smem %s60, 16, [#allocation12], [#allocation11]
    $region25: #{tpu_custom_call.1} parent=1 // pred_fallthru
      _
    // Predicated region
    $region26: #{tpu_custom_call.1} parent=1 // pred_check
      _
    $region27: #{tpu_custom_call.1} parent=1 // pred_check_branch
      %64 = sbr.rel (0) target = $region29
    $region28: #{tpu_custom_call.1} parent=1 // pred_region
      _
    $region29: #{tpu_custom_call.1} parent=1 // pred_fallthru
      _
    // Predicated region
    $region30: #{tpu_custom_call.1} parent=1 // pred_check
      _
    $region31: #{tpu_custom_call.1} parent=1 // pred_check_branch
      %66 = sbr.rel (0) target = $region33
    $region32: #{tpu_custom_call.1} parent=1 // pred_region
      %67 = dma.done [#allocation6], 128
    $region33: #{tpu_custom_call.1} parent=1 // pred_fallthru
      _
    // Predicated region
    $region34: #{tpu_custom_call.1} parent=1 // pred_check
      _
    $region35: #{tpu_custom_call.1} parent=1 // pred_check_branch
      %69 = sbr.rel (0) target = $region37
    $region36: #{tpu_custom_call.1} parent=1 // pred_region
      %70 = dma.done [#allocation8], 16
    $region37: #{tpu_custom_call.1} parent=1 // pred_fallthru
      _
    // Predicated region
    $region38: #{tpu_custom_call.1} parent=1 // pred_check
      _
    $region39: #{tpu_custom_call.1} parent=1 // pred_check_branch
      %72 = sbr.rel (0) target = $region41
    $region40: #{tpu_custom_call.1} parent=1 // pred_region
      %73 = dma.done [#allocation11], 16
    $region41: #{tpu_custom_call.1} parent=1 // pred_fallthru
      _
    // Predicated region
    $region42: #{tpu_custom_call.1} parent=1 // pred_check
      _
    $region43: #{tpu_custom_call.1} parent=1 // pred_check_branch
      %75 = sbr.rel (0) target = $region45
    $region44: #{tpu_custom_call.1} parent=1 // pred_region
      %76 = dma.done [#allocation11], 16
    $region45: #{tpu_custom_call.1} parent=1 // pred_fallthru
      _
    %77 = sfence
    %v78 = vld [vmem:[#allocation5] sm:$0xff]
    %s79 = sld [smem:[#allocation9]]
    %v80 = vstv %s79
    %v81 = vmul.f32 %v78, %v80
    %s82 = sld [smem:[#allocation10]]
    %v83 = vstv %s82
    %v84 = vadd.f32 %v81, %v83
    %v85 = vtanh.pop %v84
    %s86 = sld [smem:[#allocation12]]
    %v87 = vstv %s86
    %v88 = vmul.f32 %v85, %v87
    %s89 = sld [smem:[#allocation9 + $0x1]]
    %v90 = vstv %s89
    %v91 = vmul.f32 %v78, %v90
    %s92 = sld [smem:[#allocation10 + $0x1]]
    %v93 = vstv %s92
    %v94 = vadd.f32 %v91, %v93
    %v95 = vtanh.pop %v94
    %s96 = sld [smem:[#allocation12 + $0x1]]
    %v97 = vstv %s96
    %v98 = vmul.f32 %v95, %v97
    %v99 = vadd.f32 %v88, %v98
    %s100 = sld [smem:[#allocation9 + $0x2]]
    %v101 = vstv %s100
    %v102 = vmul.f32 %v78, %v101
    %s103 = sld [smem:[#allocation10 + $0x2]]
    %v104 = vstv %s103
    %v105 = vadd.f32 %v102, %v104
    %v106 = vtanh.pop %v105
    %s107 = sld [smem:[#allocation12 + $0x2]]
    %v108 = vstv %s107
    %v109 = vmul.f32 %v106, %v108
    %v110 = vadd.f32 %v99, %v109
    %s111 = sld [smem:[#allocation9 + $0x3]]
    %v112 = vstv %s111
    %v113 = vmul.f32 %v78, %v112
    %s114 = sld [smem:[#allocation10 + $0x3]]
    %v115 = vstv %s114
    %v116 = vadd.f32 %v113, %v115
    %v117 = vtanh.pop %v116
    %s118 = sld [smem:[#allocation12 + $0x3]]
    %v119 = vstv %s118
    %v120 = vmul.f32 %v117, %v119
    %v121 = vadd.f32 %v110, %v120
    %s122 = sld [smem:[#allocation9 + $0x4]]
    %v123 = vstv %s122
    %v124 = vmul.f32 %v78, %v123
    %s125 = sld [smem:[#allocation10 + $0x4]]
    %v126 = vstv %s125
    %v127 = vadd.f32 %v124, %v126
    %v128 = vtanh.pop %v127
    %s129 = sld [smem:[#allocation12 + $0x4]]
    %v130 = vstv %s129
    %v131 = vmul.f32 %v128, %v130
    %v132 = vadd.f32 %v121, %v131
    %s133 = sld [smem:[#allocation4]]
    %v134 = vstv %s133
    %v135 = vadd.f32 %v132, %v134
    %136 = vst [vmem:[#allocation13] sm:$0xff] %v135
    // Predicated region
    $region46: #{tpu_custom_call.1} parent=1 // pred_check
      _
    $region47: #{tpu_custom_call.1} parent=1 // pred_check_branch
      %138 = sbr.rel (0) target = $region49
    $region48: #{tpu_custom_call.1} parent=1 // pred_region
      %s140 = ssub.s32 128, 128
      %141 = vsyncadd [#allocation7], %s140
      %s143 = sshll.u32 [#allocation13], 4
      %s144 = int_to_ptr.vmem [resolvable:$true] %s143
      %146 = dma.vmem_to_hbm [thread:$0]  %s144, 128, %s7, [#allocation7]
    $region49: #{tpu_custom_call.1} parent=1 // pred_fallthru
      _
    // Predicated region
    $region50: #{tpu_custom_call.1} parent=1 // pred_check
      _
    $region51: #{tpu_custom_call.1} parent=1 // pred_check_branch
      %148 = sbr.rel (0) target = $region53
    $region52: #{tpu_custom_call.1} parent=1 // pred_region
      %149 = dma.done [#allocation7], 128
    $region53: #{tpu_custom_call.1} parent=1 // pred_fallthru
      _
    %150 = vsyncpa [#allocation6], 1
    %151 = vsyncpa [#allocation7], 1
    %152 = vsyncpa [#allocation8], 1
    %153 = vsyncpa [#allocation11], 1

</llo_original>
